<compile_context>
chip_gen: v7x
topology: tpu7x:2x2x1
jax: 0.10.0
libtpu: 0.0.40
codegen_flags: <defaults>
</compile_context>

<pallas_src>
import functools
import math

import jax
import jax.numpy as jnp
from jax.experimental import pallas as pl
from jax.experimental.pallas import tpu as pltpu


def _arcface_kernel(xn_ref, wtn_ref, gt_ref, out_ref,
                    m_ref, l_ref, lgt_ref, *,
                    scale, cos_y, sin_y, num_classes, block_c, has_class_pad):
    c = pl.program_id(1)
    nc = pl.num_programs(1)

    # ---- per-batch-tile prologue: reset accumulators ----
    @pl.when(c == 0)
    def _():
        m_ref[...] = jnp.full(m_ref.shape, -1e30, dtype=jnp.float32)
        l_ref[...] = jnp.zeros(l_ref.shape, dtype=jnp.float32)
        lgt_ref[...] = jnp.zeros(lgt_ref.shape, dtype=jnp.float32)

    # cos_score tile on the MXU: bf16 operands (pre-normalized in the
    # wrapper), f32 accumulation, contract emb dim of both operands (no .T).
    cos = jax.lax.dot_general(
        xn_ref[...], wtn_ref[...],
        dimension_numbers=(((1,), (1,)), ((), ())),
        preferred_element_type=jnp.float32)                      # (TM, TC)

    tm, tc = cos.shape
    gt = gt_ref[...]                                             # (TM, 1) int32
    col0 = c * block_c
    cls_idx = jax.lax.broadcasted_iota(jnp.int32, (tm, tc), 1) + col0
    is_gt = cls_idx == gt                                        # (TM, TC)

    # Gather cos_score at the gt column. Only meaningful for rows whose gt
    # falls inside this class tile; masked use below makes other rows inert.
    cos_gt_raw = jnp.sum(jnp.where(is_gt, cos, 0.0), axis=1, keepdims=True)
    cos_x = jnp.clip(cos_gt_raw, 0.0, 1.0)
    sin_x = jnp.clip(jnp.sqrt(jnp.maximum(1.0 - cos_x * cos_x, 0.0)), 0.0, 1.0)
    cos_xm = cos_x * cos_y - sin_x * sin_y                       # (TM, 1)
    delta = cos_xm - cos_x                                       # (TM, 1)

    # Fused one-hot: add the margin delta only on the gt column.
    logits = scale * (cos + jnp.where(is_gt, delta, 0.0))        # (TM, TC)

    # scale * margin-adjusted gt logit (accumulated only in the gt's tile).
    row_has_gt = jnp.logical_and(gt >= col0, gt < col0 + block_c)  # (TM, 1)
    lgt_ref[...] += jnp.where(row_has_gt, scale * (cos_gt_raw + delta), 0.0)

    # ---- online softmax (LSE) over the class axis ----
    def lse_update(lg):
        m_prev = m_ref[...]
        m_new = jnp.maximum(m_prev, jnp.max(lg, axis=1, keepdims=True))
        alpha = jnp.exp(m_prev - m_new)
        l_ref[...] = alpha * l_ref[...] + jnp.sum(jnp.exp(lg - m_new),
                                                  axis=1, keepdims=True)
        m_ref[...] = m_new

    if has_class_pad:
        # Padded class columns only exist in the last class tile (statically
        # known), so gate the -1e30 masking there and keep interior steps free
        # of the extra compare + select.
        @pl.when(c == nc - 1)
        def _():
            lse_update(jnp.where(cls_idx < num_classes, logits, -1e30))

        @pl.when(c != nc - 1)
        def _():
            lse_update(logits)
    else:
        lse_update(logits)

    # ---- epilogue: per-row cross-entropy contribution ----
    @pl.when(c == nc - 1)
    def _():
        lse = m_ref[...] + jnp.log(l_ref[...])
        out_ref[...] = lse - lgt_ref[...]


def _round_up(v, m):
    return (v + m - 1) // m * m


def arcface_header(x, wt, gt, *, scale=64.0, margin=0.5,
                   block_b=None, block_c=1024,
                   vmem_budget_bytes=32 * 1024 * 1024):
    """ArcFaceHeader.forward. x: (B,E), wt: (C,E), gt: (B,) int. Returns f32 scalar."""
    B, E = x.shape
    C, E2 = wt.shape
    assert E == E2
    eps = 1e-12  # F.normalize default eps

    # ---- pad the embedding dim to a lane multiple (zeros preserve norms/dots) ----
    Ep = _round_up(E, 128)
    x32 = x.astype(jnp.float32)
    w32 = wt.astype(jnp.float32)
    if Ep != E:
        x32 = jnp.pad(x32, ((0, 0), (0, Ep - E)))
        w32 = jnp.pad(w32, ((0, 0), (0, Ep - E)))

    # ---- hoisted normalizations: f32 math, single bf16 cast ----
    xn = (x32 / jnp.maximum(
        jnp.sqrt(jnp.sum(x32 * x32, axis=1, keepdims=True)), eps)
          ).astype(jnp.bfloat16)
    wn = (w32 / jnp.maximum(
        jnp.sqrt(jnp.sum(w32 * w32, axis=1, keepdims=True)), eps)
          ).astype(jnp.bfloat16)

    # ---- tile selection (VMEM-budgeted; v7x has only 64 MiB) ----
    TC = min(block_c, _round_up(C, 16))
    if block_b is None:
        wt_buf = 2 * TC * Ep * 2            # double-buffered bf16 weight tile
        x_row = 2 * Ep * 2                  # double-buffered bf16 xn bytes / row
        tmp_row = 6 * TC * 4                # ~live f32 (TM, TC) temps / row
        tm_fit = max(16, (vmem_budget_bytes - wt_buf) // (x_row + tmp_row))
        TM = int(min(tm_fit, _round_up(B, 16), 2048))
        TM = max(16, (TM // 16) * 16)
        # Megacore (v7x): keep >= 2 batch tiles for larger batches so the
        # "parallel" grid dim actually shards across both TensorCores.
        if TM >= B and B >= 256:
            TM = _round_up(-(-B // 2), 16)
    else:
        TM = min(block_b, _round_up(B, 16))

    Bp = _round_up(B, TM)
    Cp = _round_up(C, TC)
    has_class_pad = Cp != C

    if Bp != B:
        xn = jnp.pad(xn, ((0, Bp - B), (0, 0)))
        gt = jnp.pad(gt, (0, Bp - B))
    if has_class_pad:
        wn = jnp.pad(wn, ((0, Cp - C), (0, 0)))
    gt2d = gt.reshape(Bp, 1).astype(jnp.int32)

    # VMEM limit from the actual working set (+ headroom), not a blanket value.
    vmem_est = (2 * TC * Ep * 2            # wt double buffer
                + 2 * TM * Ep * 2          # xn double buffer
                + 6 * TM * TC * 4          # live f32 temporaries
                + 4 * TM * 4               # (TM,1) scratch + output
                + (1 << 20))               # slack
    vmem_limit = int(min(max(vmem_est * 3 // 2, 24 * 1024 * 1024),
                         100 * 1024 * 1024))

    kernel = functools.partial(
        _arcface_kernel, scale=float(scale),
        cos_y=math.cos(margin), sin_y=math.sin(margin),
        num_classes=C, block_c=TC, has_class_pad=has_class_pad)

    per_row = pl.pallas_call(
        kernel,
        out_shape=jax.ShapeDtypeStruct((Bp, 1), jnp.float32),
        grid_spec=pltpu.PrefetchScalarGridSpec(
            num_scalar_prefetch=0,
            grid=(Bp // TM, Cp // TC),
            in_specs=[
                pl.BlockSpec((TM, Ep), lambda i, c: (i, 0)),   # normalized x (bf16)
                pl.BlockSpec((TC, Ep), lambda i, c: (c, 0)),   # normalized wt tile (bf16, streamed)
                pl.BlockSpec((TM, 1), lambda i, c: (i, 0)),    # gt labels
            ],
            out_specs=pl.BlockSpec((TM, 1), lambda i, c: (i, 0)),
            scratch_shapes=[
                pltpu.VMEM((TM, 1), jnp.float32),   # running max
                pltpu.VMEM((TM, 1), jnp.float32),   # running sum-exp
                pltpu.VMEM((TM, 1), jnp.float32),   # scale * margin-adjusted gt logit
            ]),
        compiler_params=pltpu.CompilerParams(
            dimension_semantics=("parallel", "arbitrary"),
            vmem_limit_bytes=vmem_limit),
    )(xn, wn, gt2d)

    # nn.CrossEntropyLoss() default 'mean' reduction, done outside the kernel
    # so batch tiles stay independent (megacore-shardable); padded rows dropped.
    return jnp.mean(per_row[:B, 0])


# ----------------------------- references ---------------------------------
def _reference_f32(x, wt, gt, *, scale=64.0, margin=0.5):
    eps = 1e-12
    x = x.astype(jnp.float32)
    wt = wt.astype(jnp.float32)
    xn = x / jnp.maximum(jnp.sqrt(jnp.sum(x * x, axis=1, keepdims=True)), eps)
    wn = wt / jnp.maximum(jnp.sqrt(jnp.sum(wt * wt, axis=1, keepdims=True)), eps)
    cos = xn @ wn.T
    onehot = jax.nn.one_hot(gt, wt.shape[0], dtype=jnp.float32)
    cos_x = jnp.clip(jnp.take_along_axis(cos, gt[:, None], axis=1), 0.0, 1.0)
    sin_x = jnp.clip(jnp.sqrt(1.0 - cos_x ** 2), 0.0, 1.0)
    cos_xm = cos_x * math.cos(margin) - sin_x * math.sin(margin)
    logits = scale * (onehot * (cos_xm - cos_x) + cos)
    logp = jax.nn.log_softmax(logits, axis=1)
    return -jnp.mean(jnp.take_along_axis(logp, gt[:, None], axis=1))


def _reference_bf16(x, wt, gt, *, scale=64.0, margin=0.5):
    # Mirrors the kernel's numerics (f32 normalize -> single bf16 cast, bf16
    # MXU operands, f32 accumulation / softmax) for a tight algorithmic check.
    eps = 1e-12
    x = x.astype(jnp.float32)
    wt = wt.astype(jnp.float32)
    xn = (x / jnp.maximum(jnp.sqrt(jnp.sum(x * x, axis=1, keepdims=True)), eps)
          ).astype(jnp.bfloat16)
    wn = (wt / jnp.maximum(jnp.sqrt(jnp.sum(wt * wt, axis=1, keepdims=True)), eps)
          ).astype(jnp.bfloat16)
    cos = jax.lax.dot_general(
        xn, wn,
        dimension_numbers=(((1,), (1,)), ((), ())),
        preferred_element_type=jnp.float32)
    onehot = jax.nn.one_hot(gt, wt.shape[0], dtype=jnp.float32)
    cos_x = jnp.clip(jnp.take_along_axis(cos, gt[:, None], axis=1), 0.0, 1.0)
    sin_x = jnp.clip(jnp.sqrt(1.0 - cos_x ** 2), 0.0, 1.0)
    cos_xm = cos_x * math.cos(margin) - sin_x * math.sin(margin)
    logits = scale * (onehot * (cos_xm - cos_x) + cos)
    logp = jax.nn.log_softmax(logits, axis=1)
    return -jnp.mean(jnp.take_along_axis(logp, gt[:, None], axis=1))


if __name__ == "__main__":
    def run_case(case_idx, B, C, E, **kw):
        key = jax.random.fold_in(jax.random.PRNGKey(0), case_idx)
        kx, kw_, kg = jax.random.split(key, 3)
        x = jax.random.normal(kx, (B, E), dtype=jnp.float32) * 3.0
        # kaiming_normal_ on (num_classes, emb_size): fan_in = E, gain = sqrt(2)
        wt = jax.random.normal(kw_, (C, E), dtype=jnp.float32) * math.sqrt(2.0 / E)
        gt = jax.random.randint(kg, (B,), 0, C, dtype=jnp.int32)

        out = arcface_header(x, wt, gt, **kw)
        jax.block_until_ready(out)

        refbf = _reference_bf16(x, wt, gt)
        ref32 = _reference_f32(x, wt, gt)
        assert out.shape == ()
        assert bool(jnp.isfinite(out))
        # tight check vs a reference with matching (bf16 matmul) numerics
        assert jnp.allclose(out, refbf, rtol=5e-3, atol=5e-3), (out, refbf)
        # looser check vs the pure-f32 math (scale=64 amplifies bf16 rounding)
        assert jnp.allclose(out, ref32, rtol=3e-2, atol=2e-1), (out, ref32)

    # Small case: single batch tile, single class tile, padded emb dim.
    run_case(0, B=8, C=16, E=32)
    # Multi class tiles (last one partially padded) + padded batch rows,
    # exercising the online softmax, last-tile class masking, gt-tile gather.
    run_case(1, B=20, C=300, E=64, block_c=128)
    # Moderate case with auto-tiling: E padded 192->256, multiple class tiles,
    # batch split into 2 "parallel" tiles (megacore path), batch padding.
    run_case(2, B=272, C=2600, E=192)

    print("KERNEL_OK")
</pallas_src>

<mosaic_0001>
module attributes {stable_mosaic.version = 11 : i64} {
  func.func @_arcface_kernel(%arg0: i32, %arg1: i32, %arg2: memref<16x128xbf16, #tpu.memory_space<vmem>>, %arg3: memref<16x128xbf16, #tpu.memory_space<vmem>>, %arg4: memref<16x1xi32, #tpu.memory_space<vmem>>, %arg5: memref<16x1xf32, #tpu.memory_space<vmem>>, %arg6: memref<16x1xf32, #tpu.memory_space<vmem>>, %arg7: memref<16x1xf32, #tpu.memory_space<vmem>>, %arg8: memref<16x1xf32, #tpu.memory_space<vmem>>) attributes {dimension_semantics = [#tpu.dimension_semantics<parallel>, #tpu.dimension_semantics<arbitrary>], iteration_bounds = array<i64: 1, 1>, scalar_prefetch = 0 : i64, scratch_operands = 3 : i64, tpu.core_type = #tpu.core_type<tc>, window_params = [{transform_indices = @transform_0, window_bounds = array<i64: 16, 128>}, {transform_indices = @transform_1, window_bounds = array<i64: 16, 128>}, {transform_indices = @transform_2, window_bounds = array<i64: 16, 1>}, {transform_indices = @transform_3, window_bounds = array<i64: 16, 1>}]} {
    %c0_i32 = arith.constant 0 : i32
    %0 = arith.cmpi eq, %arg1, %c0_i32 : i32
    %1 = arith.extui %0 : i1 to i32
    %c0_i32_0 = arith.constant 0 : i32
    %2 = arith.cmpi ne, %1, %c0_i32_0 : i32
    scf.if %2 {
      %cst_37 = arith.constant -1.000000e+30 : f32
      %77 = vector.broadcast %cst_37 : f32 to vector<16x1xf32>
      %c0_38 = arith.constant 0 : index
      %c0_39 = arith.constant 0 : index
      %78 = vector.load %arg6[%c0_38, %c0_39] : memref<16x1xf32, #tpu.memory_space<vmem>>, vector<16x1xf32>
      tpu.vector_store %arg6[%c0_38, %c0_39], %77 {strides = array<i32>} : memref<16x1xf32, #tpu.memory_space<vmem>>, vector<16x1xf32>,
      %cst_40 = arith.constant 0.000000e+00 : f32
      %79 = vector.broadcast %cst_40 : f32 to vector<16x1xf32>
      %c0_41 = arith.constant 0 : index
      %c0_42 = arith.constant 0 : index
      %80 = vector.load %arg7[%c0_41, %c0_42] : memref<16x1xf32, #tpu.memory_space<vmem>>, vector<16x1xf32>
      tpu.vector_store %arg7[%c0_41, %c0_42], %79 {strides = array<i32>} : memref<16x1xf32, #tpu.memory_space<vmem>>, vector<16x1xf32>,
      %cst_43 = arith.constant 0.000000e+00 : f32
      %81 = vector.broadcast %cst_43 : f32 to vector<16x1xf32>
      %c0_44 = arith.constant 0 : index
      %c0_45 = arith.constant 0 : index
      %82 = vector.load %arg8[%c0_44, %c0_45] : memref<16x1xf32, #tpu.memory_space<vmem>>, vector<16x1xf32>
      tpu.vector_store %arg8[%c0_44, %c0_45], %81 {strides = array<i32>} : memref<16x1xf32, #tpu.memory_space<vmem>>, vector<16x1xf32>,
    } else {
    }
    %c0 = arith.constant 0 : index
    %c0_1 = arith.constant 0 : index
    %3 = vector.load %arg2[%c0, %c0_1] : memref<16x128xbf16, #tpu.memory_space<vmem>>, vector<16x128xbf16>
    %c0_2 = arith.constant 0 : index
    %c0_3 = arith.constant 0 : index
    %4 = vector.load %arg3[%c0_2, %c0_3] : memref<16x128xbf16, #tpu.memory_space<vmem>>, vector<16x128xbf16>
    %cst = arith.constant dense<0.000000e+00> : vector<16x16xf32>
    %5 = tpu.matmul %3, %4, %cst {dimension_numbers = #tpu.dot_dimension_numbers<[1], [1], [0], [0], [0, 0, 1, 0], [], []>} : vector<16x128xbf16>, vector<16x128xbf16>, vector<16x16xf32> -> vector<16x16xf32>
    %c0_4 = arith.constant 0 : index
    %c0_5 = arith.constant 0 : index
    %6 = vector.load %arg4[%c0_4, %c0_5] : memref<16x1xi32, #tpu.memory_space<vmem>>, vector<16x1xi32>
    %c16_i32 = arith.constant 16 : i32
    %7 = arith.muli %arg1, %c16_i32 : i32
    %8 = tpu.iota {dimensions = array<i32: 1>} : vector<16x16xi32>
    %9 = vector.broadcast %7 : i32 to vector<16x16xi32>
    %10 = arith.addi %8, %9 : vector<16x16xi32>
    %11 = vector.broadcast %6 : vector<16x1xi32> to vector<16x16xi32>
    %12 = arith.cmpi eq, %10, %11 : vector<16x16xi32>
    %cst_6 = arith.constant 0.000000e+00 : f32
    %13 = vector.broadcast %cst_6 : f32 to vector<16x16xf32>
    %14 = arith.select %12, %5, %13 : vector<16x16xi1>, vector<16x16xf32>
    %cst_7 = arith.constant dense<0.000000e+00> : vector<16xf32>
    %15 = vector.multi_reduction <add>, %14, %cst_7 [1] : vector<16x16xf32> to vector<16xf32>
    %16 = vector.shape_cast %15 : vector<16xf32> to vector<16x1xf32>
    %cst_8 = arith.constant 0.000000e+00 : f32
    %cst_9 = arith.constant 1.000000e+00 : f32
    %17 = vector.broadcast %cst_8 : f32 to vector<16x1xf32>
    %18 = arith.maximumf %17, %16 : vector<16x1xf32>
    %19 = vector.broadcast %cst_9 : f32 to vector<16x1xf32>
    %20 = arith.minimumf %19, %18 : vector<16x1xf32>
    %21 = arith.mulf %20, %20 : vector<16x1xf32>
    %cst_10 = arith.constant 1.000000e+00 : f32
    %22 = vector.broadcast %cst_10 : f32 to vector<16x1xf32>
    %23 = arith.subf %22, %21 : vector<16x1xf32>
    %cst_11 = arith.constant 0.000000e+00 : f32
    %24 = vector.broadcast %cst_11 : f32 to vector<16x1xf32>
    %25 = arith.maximumf %23, %24 : vector<16x1xf32>
    %26 = math.sqrt %25 : vector<16x1xf32>
    %cst_12 = arith.constant 0.000000e+00 : f32
    %cst_13 = arith.constant 1.000000e+00 : f32
    %27 = vector.broadcast %cst_12 : f32 to vector<16x1xf32>
    %28 = arith.maximumf %27, %26 : vector<16x1xf32>
    %29 = vector.broadcast %cst_13 : f32 to vector<16x1xf32>
    %30 = arith.minimumf %29, %28 : vector<16x1xf32>
    %cst_14 = arith.constant 0.87758255 : f32
    %31 = vector.broadcast %cst_14 : f32 to vector<16x1xf32>
    %32 = arith.mulf %20, %31 : vector<16x1xf32>
    %cst_15 = arith.constant 0.47942555 : f32
    %33 = vector.broadcast %cst_15 : f32 to vector<16x1xf32>
    %34 = arith.mulf %30, %33 : vector<16x1xf32>
    %35 = arith.subf %32, %34 : vector<16x1xf32>
    %36 = arith.subf %35, %20 : vector<16x1xf32>
    %cst_16 = arith.constant 0.000000e+00 : f32
    %37 = vector.shape_cast %36 : vector<16x1xf32> to vector<16x1xf32>
    %38 = vector.broadcast %37 : vector<16x1xf32> to vector<16x16xf32>
    %39 = vector.broadcast %cst_16 : f32 to vector<16x16xf32>
    %40 = arith.select %12, %38, %39 : vector<16x16xi1>, vector<16x16xf32>
    %41 = arith.addf %5, %40 : vector<16x16xf32>
    %cst_17 = arith.constant 6.400000e+01 : f32
    %42 = vector.broadcast %cst_17 : f32 to vector<16x16xf32>
    %43 = arith.mulf %42, %41 : vector<16x16xf32>
    %44 = vector.broadcast %7 : i32 to vector<16x1xi32>
    %45 = arith.cmpi sge, %6, %44 : vector<16x1xi32>
    %c16_i32_18 = arith.constant 16 : i32
    %46 = arith.addi %7, %c16_i32_18 : i32
    %47 = vector.broadcast %46 : i32 to vector<16x1xi32>
    %48 = arith.cmpi slt, %6, %47 : vector<16x1xi32>
    %49 = arith.andi %45, %48 : vector<16x1xi1>
    %c0_19 = arith.constant 0 : index
    %c0_20 = arith.constant 0 : index
    %50 = vector.load %arg8[%c0_19, %c0_20] : memref<16x1xf32, #tpu.memory_space<vmem>>, vector<16x1xf32>
    %51 = arith.addf %16, %36 : vector<16x1xf32>
    %cst_21 = arith.constant 6.400000e+01 : f32
    %52 = vector.broadcast %cst_21 : f32 to vector<16x1xf32>
    %53 = arith.mulf %52, %51 : vector<16x1xf32>
    %cst_22 = arith.constant 0.000000e+00 : f32
    %54 = vector.broadcast %cst_22 : f32 to vector<16x1xf32>
    %55 = arith.select %49, %53, %54 : vector<16x1xi1>, vector<16x1xf32>
    %56 = arith.addf %50, %55 : vector<16x1xf32>
    %c0_23 = arith.constant 0 : index
    %c0_24 = arith.constant 0 : index
    %57 = vector.load %arg8[%c0_23, %c0_24] : memref<16x1xf32, #tpu.memory_space<vmem>>, vector<16x1xf32>
    tpu.vector_store %arg8[%c0_23, %c0_24], %56 {strides = array<i32>} : memref<16x1xf32, #tpu.memory_space<vmem>>, vector<16x1xf32>,
    %c0_25 = arith.constant 0 : index
    %c0_26 = arith.constant 0 : index
    %58 = vector.load %arg6[%c0_25, %c0_26] : memref<16x1xf32, #tpu.memory_space<vmem>>, vector<16x1xf32>
    %cst_27 = arith.constant dense<0xFF800000> : vector<16xf32>
    %59 = vector.multi_reduction <maximumf>, %43, %cst_27 [1] : vector<16x16xf32> to vector<16xf32>
    %60 = vector.shape_cast %59 : vector<16xf32> to vector<16x1xf32>
    %61 = arith.maximumf %58, %60 : vector<16x1xf32>
    %62 = arith.subf %58, %61 : vector<16x1xf32>
    %63 = math.exp %62 : vector<16x1xf32>
    %c0_28 = arith.constant 0 : index
    %c0_29 = arith.constant 0 : index
    %64 = vector.load %arg7[%c0_28, %c0_29] : memref<16x1xf32, #tpu.memory_space<vmem>>, vector<16x1xf32>
    %65 = arith.mulf %63, %64 : vector<16x1xf32>
    %66 = vector.broadcast %61 : vector<16x1xf32> to vector<16x16xf32>
    %67 = arith.subf %43, %66 : vector<16x16xf32>
    %68 = math.exp %67 : vector<16x16xf32>
    %cst_30 = arith.constant dense<0.000000e+00> : vector<16xf32>
    %69 = vector.multi_reduction <add>, %68, %cst_30 [1] : vector<16x16xf32> to vector<16xf32>
    %70 = vector.shape_cast %69 : vector<16xf32> to vector<16x1xf32>
    %71 = arith.addf %65, %70 : vector<16x1xf32>
    %c0_31 = arith.constant 0 : index
    %c0_32 = arith.constant 0 : index
    %72 = vector.load %arg7[%c0_31, %c0_32] : memref<16x1xf32, #tpu.memory_space<vmem>>, vector<16x1xf32>
    tpu.vector_store %arg7[%c0_31, %c0_32], %71 {strides = array<i32>} : memref<16x1xf32, #tpu.memory_space<vmem>>, vector<16x1xf32>,
    %c0_33 = arith.constant 0 : index
    %c0_34 = arith.constant 0 : index
    %73 = vector.load %arg6[%c0_33, %c0_34] : memref<16x1xf32, #tpu.memory_space<vmem>>, vector<16x1xf32>
    tpu.vector_store %arg6[%c0_33, %c0_34], %61 {strides = array<i32>} : memref<16x1xf32, #tpu.memory_space<vmem>>, vector<16x1xf32>,
    %c0_i32_35 = arith.constant 0 : i32
    %74 = arith.cmpi eq, %arg1, %c0_i32_35 : i32
    %75 = arith.extui %74 : i1 to i32
    %c0_i32_36 = arith.constant 0 : i32
    %76 = arith.cmpi ne, %75, %c0_i32_36 : i32
    scf.if %76 {
      %c0_37 = arith.constant 0 : index
      %c0_38 = arith.constant 0 : index
      %77 = vector.load %arg6[%c0_37, %c0_38] : memref<16x1xf32, #tpu.memory_space<vmem>>, vector<16x1xf32>
      %c0_39 = arith.constant 0 : index
      %c0_40 = arith.constant 0 : index
      %78 = vector.load %arg7[%c0_39, %c0_40] : memref<16x1xf32, #tpu.memory_space<vmem>>, vector<16x1xf32>
      %79 = math.log %78 : vector<16x1xf32>
      %80 = arith.addf %77, %79 : vector<16x1xf32>
      %c0_41 = arith.constant 0 : index
      %c0_42 = arith.constant 0 : index
      %81 = vector.load %arg8[%c0_41, %c0_42] : memref<16x1xf32, #tpu.memory_space<vmem>>, vector<16x1xf32>
      %82 = arith.subf %80, %81 : vector<16x1xf32>
      %c0_43 = arith.constant 0 : index
      %c0_44 = arith.constant 0 : index
      %83 = vector.load %arg5[%c0_43, %c0_44] : memref<16x1xf32, #tpu.memory_space<vmem>>, vector<16x1xf32>
      tpu.vector_store %arg5[%c0_43, %c0_44], %82 {strides = array<i32>} : memref<16x1xf32, #tpu.memory_space<vmem>>, vector<16x1xf32>,
    } else {
    }
    return
  }
  func.func @transform_0(%arg0: i32, %arg1: i32) -> (i32, i32) {
    %c0_i32 = arith.constant 0 : i32
    %c0_i32_0 = arith.constant 0 : i32
    return %arg0, %c0_i32 : i32, i32
  }
  func.func @transform_1(%arg0: i32, %arg1: i32) -> (i32, i32) {
    %c0_i32 = arith.constant 0 : i32
    %c0_i32_0 = arith.constant 0 : i32
    return %arg1, %c0_i32 : i32, i32
  }
  func.func @transform_2(%arg0: i32, %arg1: i32) -> (i32, i32) {
    %c0_i32 = arith.constant 0 : i32
    %c0_i32_0 = arith.constant 0 : i32
    return %arg0, %c0_i32 : i32, i32
  }
  func.func @transform_3(%arg0: i32, %arg1: i32) -> (i32, i32) {
    %c0_i32 = arith.constant 0 : i32
    %c0_i32_0 = arith.constant 0 : i32
    return %arg0, %c0_i32 : i32, i32
  }
}

</mosaic_0001>

<llo_original>
// kernel: tpu_custom_call.1
$region0: #{tpu_custom_call.1}
  #allocation0 [shape = 'u32[]', space=smem, size = 0x4, offset = 0x4, fixed_abs, tag = 'smem constant byte address 0x4 - core index']
  #allocation1 [shape = 'u32[144,128]{1,0:T(1,128)}', space=vmem, size = 0x12000, scoped, tag = 'internal scratch']
  #allocation2 [shape = 'f32[16,1]{1,0:T(8,128)}', space=vmem, size = 0x2000, scoped, tag = 'scratch operand']
  #allocation3 [shape = 'f32[16,1]{1,0:T(8,128)}', space=vmem, size = 0x2000, scoped, tag = 'scratch operand']
  #allocation4 [shape = 'f32[16,1]{1,0:T(8,128)}', space=vmem, size = 0x2000, scoped, tag = 'scratch operand']
  %s0 = inlined_call_operand.vmem [shape: bf16[16,128], index: 0, kind: input, shape index: {}]
  %s1 = inlined_call_operand.vmem [shape: bf16[16,128], index: 1, kind: input, shape index: {}]
  %s2 = inlined_call_operand.vmem [shape: s32[16,1], index: 2, kind: input, shape index: {}]
  %s3 = inlined_call_operand.vmem [shape: f32[16,1], index: 3, kind: output, shape index: {}]
  %s4 = sld [smem:[#allocation0]]
  $region30: #{tpu_custom_call.1} parent=0
    _
  %s6 = ssub.s32 1, %s4
  %s7 = scalar_select 0, %s6, %s4
  // Predicated region
  $region2: #{tpu_custom_call.1} parent=0 // pred_check
    _
  $region3: #{tpu_custom_call.1} parent=0 // pred_check_branch
    %9 = sbr.rel (0) target = $region5
  $region4: #{tpu_custom_call.1} parent=0 // pred_region
    _
  $region5: #{tpu_custom_call.1} parent=0 // pred_fallthru
    _
  // Predicated region
  $region6: #{tpu_custom_call.1} parent=0 // pred_check
    _
  $region7: #{tpu_custom_call.1} parent=0 // pred_check_branch
    %11 = sbr.rel (0) target = $region9
  $region8: #{tpu_custom_call.1} parent=0 // pred_region
    _
  $region9: #{tpu_custom_call.1} parent=0 // pred_fallthru
    _
  // Predicated region
  $region10: #{tpu_custom_call.1} parent=0 // pred_check
    _
  $region11: #{tpu_custom_call.1} parent=0 // pred_check_branch
    %13 = sbr.rel (0) target = $region13
  $region12: #{tpu_custom_call.1} parent=0 // pred_region
    _
  $region13: #{tpu_custom_call.1} parent=0 // pred_fallthru
    _
  %p15 = scmp.eq.s32.totalorder 0, 0
  // Predicated region
  $region14: #{tpu_custom_call.1} parent=0 // pred_check
    %p16 = pneg %p15
  $region15: #{tpu_custom_call.1} parent=0 // pred_check_branch
    %18 = sbr.rel (%p16) target = $region17
  $region16: #{tpu_custom_call.1} parent=0 // pred_region
    %vm19 = vcmask 7168
    %20 = vst.msk [vmem:[#allocation2] sm:$0xff] %vm19, -1e+30
    %21 = vst.msk [vmem:[#allocation2 + $0x8] sm:$0xff] %vm19, -1e+30
    %22 = vst.msk [vmem:[#allocation3] sm:$0xff] %vm19, 0.0
    %23 = vst.msk [vmem:[#allocation3 + $0x8] sm:$0xff] %vm19, 0.0
    %24 = vst.msk [vmem:[#allocation4] sm:$0xff] %vm19, 0.0
    %25 = vst.msk [vmem:[#allocation4 + $0x8] sm:$0xff] %vm19, 0.0
  $region17: #{tpu_custom_call.1} parent=0 // pred_fallthru
    _
  %v26 = vld [vmem:[%s0] sm:$0xf]
  %v27 = vld [vmem:[%s0 + $0x4] sm:$0xf]
  %v28 = vld [vmem:[%s1] sm:$0xf]
  %v29 = vld [vmem:[%s1 + $0x4] sm:$0xf]
  %v32 = vunpack.c.l.b16 %v26
  %v33 = vunpack.c.l.b16 %v27
  %v34 = vpack.c.b16 %v33, %v32
  %v38 = vunpack.c.l.b16 %v28
  %v39 = vunpack.c.l.b16 %v29
  %v40 = vpack.c.b16 %v39, %v38
  %42 = vmatprep.subr.bf16.mxu0 0
  %43 = vmatpush1.bf16.xpose.msra.mxu0 %v40
  %44 = vmatprep.subr.bf16.mxu0 0
  %45 = vmatpush1.bf16.xpose.msra.mxu0 0
  %46 = vmatprep.subr.bf16.mxu0 0
  %47 = vmatpush1.bf16.xpose.msra.mxu0 0
  %48 = vmatprep.subr.bf16.mxu0 0
  %49 = vmatpush1.bf16.xpose.msra.mxu0 0
  %50 = vmatprep.subr.bf16.mxu0 0
  %51 = vmatpush1.bf16.xpose.msra.mxu0 0
  %52 = vmatprep.subr.bf16.mxu0 0
  %53 = vmatpush1.bf16.xpose.msra.mxu0 0
  %54 = vmatprep.subr.bf16.mxu0 0
  %55 = vmatpush1.bf16.xpose.msra.mxu0 0
  %56 = vmatprep.subr.bf16.mxu0 0
  %57 = vmatpush1.bf16.xpose.msra.mxu0 0
  %58 = vmatprep.subr.bf16.mxu0 0
  %59 = vmatpush1.bf16.xpose.msra.mxu0 0
  %60 = vmatprep.subr.bf16.mxu0 0
  %61 = vmatpush1.bf16.xpose.msra.mxu0 0
  %62 = vmatprep.subr.bf16.mxu0 0
  %63 = vmatpush1.bf16.xpose.msra.mxu0 0
  %64 = vmatprep.subr.bf16.mxu0 0
  %65 = vmatpush1.bf16.xpose.msra.mxu0 0
  %66 = vmatprep.subr.bf16.mxu0 0
  %67 = vmatpush1.bf16.xpose.msra.mxu0 0
  %68 = vmatprep.subr.bf16.mxu0 0
  %69 = vmatpush1.bf16.xpose.msra.mxu0 0
  %70 = vmatprep.subr.bf16.mxu0 0
  %71 = vmatpush1.bf16.xpose.msra.mxu0 0
  %72 = vmatprep.subr.bf16.mxu0 0
  %73 = vmatpush1.bf16.xpose.msra.mxu0 0
  %74 = vmatprep.mubr.bf16.mxu0 0
  %75 = vmatmul.mubr.bf16.gmra.mrb[0].mxu0 %v34
  %v76 = vpop.f32.mrb[0].mxu0
  %v77 = vadd.f32 0.0, %v76
  %v78 = vpop.f32.mrb[0].mxu0
  %v79 = vpop.f32.mrb[0].mxu0
  %v80 = vadd.f32 0.0, %v79
  %v81 = vpop.f32.mrb[0].mxu0
  %82 = vdwg.mxu0
  %v83 = vld [vmem:[%s2] sm:$0xff]
  %v84 = vld [vmem:[%s2 + $0x8] sm:$0xff]
  %s85 = smul.u32 0, 16
  %v86 = vlaneseq
  %v87 = vand.u32 %v86, 127
  %v88 = vstv %s85
  %v89 = vadd.s32 %v87, %v88
  %90 = vset.pattern.permute.xlu0 0
  %91 = vperm.xlu0 %90, %v83
  %v92 = vpop.permute.xlu0 %91
  %93 = vset.pattern.permute.xlu0 0
  %94 = vperm.xlu0 %93, %v84
  %v95 = vpop.permute.xlu0 %94
  %vm96 = vcmp.eq.s32.totalorder %v89, %v92
  %vm97 = vcmp.eq.s32.totalorder %v89, %v95
  %v98 = vsel %vm96, %v77, 0.0
  %v99 = vsel %vm97, %v80, 0.0
  %vm100 = vcmask 130048
  %v101 = vsel %vm100, %v98, 0.0
  %102 = vadd.xlane.f32.xlu0 %v101
  %v103 = vpop.xlane.xlu0 %102
  %v104 = vsel %vm100, %v99, 0.0
  %105 = vadd.xlane.f32.xlu0 %v104
  %v106 = vpop.xlane.xlu0 %105
  %v107 = vmax.f32 %v103, 0.0
  %v108 = vmax.f32 %v106, 0.0
  %v109 = vmin.f32 %v107, 1.0
  %v110 = vmin.f32 %v108, 1.0
  %v111 = vmul.f32 %v109, %v109
  %v112 = vmul.f32 %v110, %v110
  %v113 = vsub.f32 1.0, %v111
  %v114 = vsub.f32 1.0, %v112
  %v115 = vmax.f32 %v113, 0.0
  %v116 = vmax.f32 %v114, 0.0
  %v117 = vrsqrt.pop %v115
  %v118 = vmul.f32 %v115, %v117
  %vm119 = vcmp.eq.f32.partialorder %v115, inf
  %v120 = vsel %vm119, %v115, %v118
  %vm121 = vcmp.eq.f32.partialorder %v115, 0.0
  %v122 = vand.u32 %v115, 2147483648
  %v123 = vsel %vm121, %v122, %v120
  %v124 = vrsqrt.pop %v116
  %v125 = vmul.f32 %v116, %v124
  %vm126 = vcmp.eq.f32.partialorder %v116, inf
  %v127 = vsel %vm126, %v116, %v125
  %vm128 = vcmp.eq.f32.partialorder %v116, 0.0
  %v129 = vand.u32 %v116, 2147483648
  %v130 = vsel %vm128, %v129, %v127
  %v131 = vmax.f32 %v123, 0.0
  %v132 = vmax.f32 %v130, 0.0
  %v133 = vmin.f32 %v131, 1.0
  %v134 = vmin.f32 %v132, 1.0
  %v135 = vmul.f32 %v109, 0.87758255
  %v136 = vmul.f32 %v110, 0.87758255
  %v137 = vmul.f32 %v133, 0.47942555
  %v138 = vmul.f32 %v134, 0.47942555
  %v139 = vsub.f32 %v135, %v137
  %v140 = vsub.f32 %v136, %v138
  %v141 = vsub.f32 %v139, %v109
  %v142 = vsub.f32 %v140, %v110
  %v143 = vsel %vm96, %v141, 0.0
  %v144 = vsel %vm97, %v142, 0.0
  %v145 = vadd.f32 %v77, %v143
  %v146 = vadd.f32 %v80, %v144
  %v147 = vmul.f32 %v145, 64.0
  %v148 = vmul.f32 %v146, 64.0
  %vm149 = vcmp.ge.s32.totalorder %v83, %v88
  %vm150 = vcmp.ge.s32.totalorder %v84, %v88
  %s151 = sadd.s32 %s85, 16
  %v152 = vstv %s151
  %vm153 = vcmp.lt.s32.totalorder %v83, %v152
  %vm154 = vcmp.lt.s32.totalorder %v84, %v152
  %vm155 = vmand %vm149, %vm153
  %vm156 = vmand %vm150, %vm154
  %v157 = vld [vmem:[#allocation4] sm:$0xff]
  %v158 = vld [vmem:[#allocation4 + $0x8] sm:$0xff]
  %v159 = vadd.f32 %v103, %v141
  %v160 = vadd.f32 %v106, %v142
  %v161 = vmul.f32 %v159, 64.0
  %v162 = vmul.f32 %v160, 64.0
  %v163 = vsel %vm155, %v161, 0.0
  %v164 = vsel %vm156, %v162, 0.0
  %v165 = vadd.f32 %v157, %v163
  %v166 = vadd.f32 %v158, %v164
  %vm167 = vcmask 7168
  %168 = vst.msk [vmem:[#allocation4] sm:$0xff] %vm167, %v165
  %169 = vst.msk [vmem:[#allocation4 + $0x8] sm:$0xff] %vm167, %v166
  %v170 = vld [vmem:[#allocation2] sm:$0xff]
  %v171 = vld [vmem:[#allocation2 + $0x8] sm:$0xff]
  %v172 = vsel %vm100, %v147, -inf
  %173 = vmax.xlane.f32.xlu0 %v172
  %v174 = vpop.xlane.xlu0 %173
  %v175 = vsel %vm100, %v148, -inf
  %176 = vmax.xlane.f32.xlu0 %v175
  %v177 = vpop.xlane.xlu0 %176
  %v178 = vmax.f32 %v170, %v174
  %v179 = vmax.f32 %v171, %v177
  %v180 = vsub.f32 %v170, %v178
  %v181 = vsub.f32 %v171, %v179
  %v182 = vmul.f32 %v180, 1.442695
  %v183 = vpow.pop %v182
  %v184 = vmul.f32 %v181, 1.442695
  %v185 = vpow.pop %v184
  %v186 = vld [vmem:[#allocation3] sm:$0xff]
  %v187 = vld [vmem:[#allocation3 + $0x8] sm:$0xff]
  %v188 = vmul.f32 %v183, %v186
  %v189 = vmul.f32 %v185, %v187
  %191 = vset.pattern.permute.xlu0 0
  %192 = vperm.xlu0 %191, %v178
  %v193 = vpop.permute.xlu0 %192
  %196 = vset.pattern.permute.xlu0 0
  %197 = vperm.xlu0 %196, %v179
  %v198 = vpop.permute.xlu0 %197
  %v200 = vsub.f32 %v147, %v193
  %v201 = vsub.f32 %v148, %v198
  %v202 = vmul.f32 %v200, 1.442695
  %v203 = vpow.pop %v202
  %v204 = vmul.f32 %v201, 1.442695
  %v205 = vpow.pop %v204
  %v206 = vsel %vm100, %v203, 0.0
  %207 = vadd.xlane.f32.xlu0 %v206
  %v208 = vpop.xlane.xlu0 %207
  %v209 = vsel %vm100, %v205, 0.0
  %210 = vadd.xlane.f32.xlu0 %v209
  %v211 = vpop.xlane.xlu0 %210
  %v212 = vadd.f32 %v188, %v208
  %v213 = vadd.f32 %v189, %v211
  %214 = vst.msk [vmem:[#allocation3] sm:$0xff] %vm167, %v212
  %215 = vst.msk [vmem:[#allocation3 + $0x8] sm:$0xff] %vm167, %v213
  %216 = vst.msk [vmem:[#allocation2] sm:$0xff] %vm167, %v178
  %217 = vst.msk [vmem:[#allocation2 + $0x8] sm:$0xff] %vm167, %v179
  // Predicated region
  $region18: #{tpu_custom_call.1} parent=0 // pred_check
    %p218 = pneg %p15
  $region19: #{tpu_custom_call.1} parent=0 // pred_check_branch
    %220 = sbr.rel (%p218) target = $region21
  $region20: #{tpu_custom_call.1} parent=0 // pred_region
    %v221 = vld [vmem:[#allocation2] sm:$0xff]
    %v222 = vld [vmem:[#allocation2 + $0x8] sm:$0xff]
    %v223 = vld [vmem:[#allocation3] sm:$0xff]
    %v224 = vld [vmem:[#allocation3 + $0x8] sm:$0xff]
    %v225 = vlog2.pop %v223
    %v226 = vmul.f32 %v225, 0.6931472
    %v227 = vlog2.pop %v224
    %v228 = vmul.f32 %v227, 0.6931472
    %v229 = vadd.f32 %v221, %v226
    %v230 = vadd.f32 %v222, %v228
    %v231 = vld [vmem:[#allocation4] sm:$0xff]
    %v232 = vld [vmem:[#allocation4 + $0x8] sm:$0xff]
    %v233 = vsub.f32 %v229, %v231
    %v234 = vsub.f32 %v230, %v232
    %235 = vst.msk [vmem:[%s3] sm:$0xff] %vm167, %v233
    %236 = vst.msk [vmem:[%s3 + $0x8] sm:$0xff] %vm167, %v234
  $region21: #{tpu_custom_call.1} parent=0 // pred_fallthru
    _
  // Predicated region
  $region22: #{tpu_custom_call.1} parent=0 // pred_check
    _
  $region23: #{tpu_custom_call.1} parent=0 // pred_check_branch
    %238 = sbr.rel (0) target = $region25
  $region24: #{tpu_custom_call.1} parent=0 // pred_region
    _
  $region25: #{tpu_custom_call.1} parent=0 // pred_fallthru
    _
  // Predicated region
  $region26: #{tpu_custom_call.1} parent=0 // pred_check
    _
  $region27: #{tpu_custom_call.1} parent=0 // pred_check_branch
    %240 = sbr.rel (0) target = $region29
  $region28: #{tpu_custom_call.1} parent=0 // pred_region
    _
  $region29: #{tpu_custom_call.1} parent=0 // pred_fallthru
    _

</llo_original>
